<compile_context>
chip_gen: v7x
topology: tpu7x:2x2x1
jax: 0.10.0
libtpu: 0.0.40
codegen_flags: <defaults>
</compile_context>

<pallas_src>
import functools

import jax
import jax.numpy as jnp
from jax import lax
from jax.experimental import pallas as pl
from jax.experimental.pallas import tpu as pltpu


def _disentangle_kernel(x_ref, w1_ref, w2_ref, uniq_ref, comm_ref, *, inv_hw):
    # x_ref: (Bc, C, HW)    w1_ref / w2_ref: (C, C) torch-Linear layout (out, in)
    x = x_ref[...]                                              # (Bc, C, HW)

    # Global average pool over the lane (spatial) axis for all Bc batches at
    # once (XLU reduction).  Multiply by the exact 1/HW so the mean matches
    # AdaptiveAvgPool2d((1, 1)).
    gap = jnp.sum(x, axis=2) * inv_hw                           # (Bc, C)

    # torch Linear(bias=False): out = in @ W.T  ->  contract dim 1 with dim 1.
    h = lax.dot_general(gap, w1_ref[...], (((1,), (1,)), ((), ())),
                        preferred_element_type=jnp.float32)     # (Bc, C)
    h = jnp.maximum(h, 0.0)                                     # ReLU (VPU)
    y = lax.dot_general(h, w2_ref[...], (((1,), (1,)), ((), ())),
                        preferred_element_type=jnp.float32)     # (Bc, C)
    y = jax.nn.sigmoid(y)                                       # EUP

    # Single broadcast multiply + plain subtract:
    #   common = x * y ;  unique = x - common.
    y_b = y[:, :, None].astype(x.dtype)                         # (Bc, C, 1)
    comm = x * y_b
    comm_ref[...] = comm.astype(comm_ref.dtype)
    uniq_ref[...] = (x - comm).astype(uniq_ref.dtype)


def disentangle(x, w1, w2, *, vmem_budget_bytes=24 << 20):
    """x: (B, C, H, W); w1/w2: (C, C) torch-Linear weights (out_features, in_features).

    Returns (unique, common), each shaped (B, C, H, W).
    """
    b, c, h, w = x.shape
    hw = h * w
    x_flat = x.reshape(b, c, hw)
    itemsize = jnp.dtype(x.dtype).itemsize

    # Biggest batch chunk whose double-buffered working set fits the budget:
    # (x tile + 2 output tiles) x 2 pipeline buffers = 6 * chunk * C * HW bytes.
    per_batch = 6 * c * hw * itemsize
    chunk = max(1, min(b, vmem_budget_bytes // max(per_batch, 1)))
    while b % chunk:                      # keep the grid exact (no ragged tail)
        chunk -= 1
    num_steps = b // chunk

    kernel = functools.partial(_disentangle_kernel, inv_hw=1.0 / hw)

    grid_spec = pltpu.PrefetchScalarGridSpec(
        num_scalar_prefetch=0,
        grid=(num_steps,),
        in_specs=[
            pl.BlockSpec((chunk, c, hw), lambda i: (i, 0, 0)),   # x
            pl.BlockSpec((c, c), lambda i: (0, 0)),              # w1
            pl.BlockSpec((c, c), lambda i: (0, 0)),              # w2
        ],
        out_specs=[
            pl.BlockSpec((chunk, c, hw), lambda i: (i, 0, 0)),   # unique
            pl.BlockSpec((chunk, c, hw), lambda i: (i, 0, 0)),   # common
        ],
    )

    # Memory-bound custom call: advertise the real traffic to XLA's scheduler.
    cost = pl.CostEstimate(
        flops=int(b * (4 * c * c + 3 * c * hw)),
        transcendentals=int(b * c),
        bytes_accessed=int(3 * b * c * hw * itemsize + 2 * c * c * itemsize),
    )

    vmem_limit = int(min(64 << 20,
                         max(16 << 20,
                             per_batch * chunk + 4 * c * c * itemsize + (1 << 20))))

    uniq, comm = pl.pallas_call(
        kernel,
        out_shape=(
            jax.ShapeDtypeStruct((b, c, hw), x.dtype),
            jax.ShapeDtypeStruct((b, c, hw), x.dtype),
        ),
        grid_spec=grid_spec,
        compiler_params=pltpu.CompilerParams(
            dimension_semantics=("parallel",),   # shard batch chunks across TCs
            vmem_limit_bytes=vmem_limit,
        ),
        cost_estimate=cost,
    )(x_flat, w1, w2)

    return uniq.reshape(b, c, h, w), comm.reshape(b, c, h, w)


def _reference(x, w1, w2):
    # Plain-JAX reference of the PyTorch forward (sanity check).
    y = jnp.mean(x, axis=(2, 3))                  # GAP  -> (b, c)
    y = jnp.maximum(y @ w1.T, 0.0)                # Linear + ReLU
    y = jax.nn.sigmoid(y @ w2.T)                  # Linear + Sigmoid
    y = y[:, :, None, None]
    return x * (1.0 - y), x * y


if __name__ == "__main__":
    key = jax.random.PRNGKey(0)
    kx, k1, k2 = jax.random.split(key, 3)

    B, C, H, W = 2, 32, 16, 16                    # dim=32 matches module default
    x = jax.random.normal(kx, (B, C, H, W), dtype=jnp.float32)

    # Deterministic kaiming-like init for the two bias-free Linear layers.
    std = (2.0 / C) ** 0.5
    w1 = jax.random.normal(k1, (C, C), dtype=jnp.float32) * std
    w2 = jax.random.normal(k2, (C, C), dtype=jnp.float32) * std

    uniq, comm = disentangle(x, w1, w2)
    jax.block_until_ready((uniq, comm))

    ru, rc = _reference(x, w1, w2)
    assert jnp.allclose(uniq, ru, atol=1e-5, rtol=1e-5)
    assert jnp.allclose(comm, rc, atol=1e-5, rtol=1e-5)
    assert jnp.allclose(uniq + comm, x, atol=1e-6, rtol=1e-6)

    print("KERNEL_OK")
</pallas_src>

<mosaic_0001>
module attributes {stable_mosaic.version = 11 : i64} {
  func.func @_disentangle_kernel(%arg0: i32, %arg1: memref<2x32x256xf32, #tpu.memory_space<vmem>>, %arg2: memref<32x32xf32, #tpu.memory_space<vmem>>, %arg3: memref<32x32xf32, #tpu.memory_space<vmem>>, %arg4: memref<2x32x256xf32, #tpu.memory_space<vmem>>, %arg5: memref<2x32x256xf32, #tpu.memory_space<vmem>>) attributes {dimension_semantics = [#tpu.dimension_semantics<parallel>], iteration_bounds = array<i64: 1>, scalar_prefetch = 0 : i64, scratch_operands = 0 : i64, tpu.core_type = #tpu.core_type<tc>, window_params = [{transform_indices = @transform_0, window_bounds = array<i64: 2, 32, 256>}, {pipeline_mode = #tpu.pipeline_mode<synchronous>, transform_indices = @transform_1, window_bounds = array<i64: 32, 32>}, {pipeline_mode = #tpu.pipeline_mode<synchronous>, transform_indices = @transform_2, window_bounds = array<i64: 32, 32>}, {transform_indices = @transform_3, window_bounds = array<i64: 2, 32, 256>}, {transform_indices = @transform_4, window_bounds = array<i64: 2, 32, 256>}]} {
    %c0 = arith.constant 0 : index
    %c0_0 = arith.constant 0 : index
    %c0_1 = arith.constant 0 : index
    %0 = vector.load %arg1[%c0, %c0_0, %c0_1] : memref<2x32x256xf32, #tpu.memory_space<vmem>>, vector<2x32x256xf32>
    %cst = arith.constant dense<0.000000e+00> : vector<2x32xf32>
    %1 = vector.multi_reduction <add>, %0, %cst [2] : vector<2x32x256xf32> to vector<2x32xf32>
    %cst_2 = arith.constant 3.906250e-03 : f32
    %2 = vector.broadcast %cst_2 : f32 to vector<2x32xf32>
    %3 = arith.mulf %1, %2 : vector<2x32xf32>
    %c0_3 = arith.constant 0 : index
    %c0_4 = arith.constant 0 : index
    %4 = vector.load %arg2[%c0_3, %c0_4] : memref<32x32xf32, #tpu.memory_space<vmem>>, vector<32x32xf32>
    %cst_5 = arith.constant dense<0.000000e+00> : vector<2x32xf32>
    %5 = tpu.matmul %3, %4, %cst_5 {dimension_numbers = #tpu.dot_dimension_numbers<[1], [1], [0], [0], [0, 0, 1, 0], [], []>} : vector<2x32xf32>, vector<32x32xf32>, vector<2x32xf32> -> vector<2x32xf32>
    %cst_6 = arith.constant 0.000000e+00 : f32
    %6 = vector.broadcast %cst_6 : f32 to vector<2x32xf32>
    %7 = arith.maximumf %5, %6 : vector<2x32xf32>
    %c0_7 = arith.constant 0 : index
    %c0_8 = arith.constant 0 : index
    %8 = vector.load %arg3[%c0_7, %c0_8] : memref<32x32xf32, #tpu.memory_space<vmem>>, vector<32x32xf32>
    %cst_9 = arith.constant dense<0.000000e+00> : vector<2x32xf32>
    %9 = tpu.matmul %7, %8, %cst_9 {dimension_numbers = #tpu.dot_dimension_numbers<[1], [1], [0], [0], [0, 0, 1, 0], [], []>} : vector<2x32xf32>, vector<32x32xf32>, vector<2x32xf32> -> vector<2x32xf32>
    %10 = arith.negf %9 : vector<2x32xf32>
    %11 = math.exp %10 : vector<2x32xf32>
    %cst_10 = arith.constant 1.000000e+00 : f32
    %12 = vector.broadcast %cst_10 : f32 to vector<2x32xf32>
    %13 = arith.addf %12, %11 : vector<2x32xf32>
    %14 = arith.divf %12, %13 : vector<2x32xf32>
    %15 = vector.shape_cast %14 : vector<2x32xf32> to vector<2x32x1xf32>
    %16 = vector.broadcast %15 : vector<2x32x1xf32> to vector<2x32x256xf32>
    %17 = arith.mulf %0, %16 : vector<2x32x256xf32>
    %c0_11 = arith.constant 0 : index
    %c0_12 = arith.constant 0 : index
    %c0_13 = arith.constant 0 : index
    %18 = vector.load %arg5[%c0_11, %c0_12, %c0_13] : memref<2x32x256xf32, #tpu.memory_space<vmem>>, vector<2x32x256xf32>
    tpu.vector_store %arg5[%c0_11, %c0_12, %c0_13], %17 {strides = array<i32>} : memref<2x32x256xf32, #tpu.memory_space<vmem>>, vector<2x32x256xf32>,
    %19 = arith.subf %0, %17 : vector<2x32x256xf32>
    %c0_14 = arith.constant 0 : index
    %c0_15 = arith.constant 0 : index
    %c0_16 = arith.constant 0 : index
    %20 = vector.load %arg4[%c0_14, %c0_15, %c0_16] : memref<2x32x256xf32, #tpu.memory_space<vmem>>, vector<2x32x256xf32>
    tpu.vector_store %arg4[%c0_14, %c0_15, %c0_16], %19 {strides = array<i32>} : memref<2x32x256xf32, #tpu.memory_space<vmem>>, vector<2x32x256xf32>,
    return
  }
  func.func @transform_0(%arg0: i32) -> (i32, i32, i32) {
    %c0_i32 = arith.constant 0 : i32
    %c0_i32_0 = arith.constant 0 : i32
    %c0_i32_1 = arith.constant 0 : i32
    return %arg0, %c0_i32, %c0_i32_0 : i32, i32, i32
  }
  func.func @transform_1(%arg0: i32) -> (i32, i32) {
    %c0_i32 = arith.constant 0 : i32
    %c0_i32_0 = arith.constant 0 : i32
    %c0_i32_1 = arith.constant 0 : i32
    return %c0_i32, %c0_i32_0 : i32, i32
  }
  func.func @transform_2(%arg0: i32) -> (i32, i32) {
    %c0_i32 = arith.constant 0 : i32
    %c0_i32_0 = arith.constant 0 : i32
    %c0_i32_1 = arith.constant 0 : i32
    return %c0_i32, %c0_i32_0 : i32, i32
  }
  func.func @transform_3(%arg0: i32) -> (i32, i32, i32) {
    %c0_i32 = arith.constant 0 : i32
    %c0_i32_0 = arith.constant 0 : i32
    %c0_i32_1 = arith.constant 0 : i32
    return %arg0, %c0_i32, %c0_i32_0 : i32, i32, i32
  }
  func.func @transform_4(%arg0: i32) -> (i32, i32, i32) {
    %c0_i32 = arith.constant 0 : i32
    %c0_i32_0 = arith.constant 0 : i32
    %c0_i32_1 = arith.constant 0 : i32
    return %arg0, %c0_i32, %c0_i32_0 : i32, i32, i32
  }
}

</mosaic_0001>

<llo_original>
// kernel: tpu_custom_call.1
$region0: #{tpu_custom_call.1}
  #allocation0 [shape = 'u32[]', space=smem, size = 0x4, offset = 0x4, fixed_abs, tag = 'smem constant byte address 0x4 - core index']
  #allocation1 [shape = 'u32[144,128]{1,0:T(1,128)}', space=vmem, size = 0x12000, scoped, tag = 'internal scratch']
  %s0 = inlined_call_operand.hbm [shape: f32[2,32,256], index: 0, kind: input, shape index: {}]
  %s1 = inlined_call_operand.hbm [shape: f32[32,32], index: 1, kind: input, shape index: {}]
  %s2 = inlined_call_operand.hbm [shape: f32[32,32], index: 2, kind: input, shape index: {}]
  %s3 = inlined_call_operand.hbm [shape: f32[2,32,256], index: 3, kind: output, shape index: {0}]
  %s4 = inlined_call_operand.hbm [shape: f32[2,32,256], index: 4, kind: output, shape index: {1}]
  %5 = xla_tuple %s3, %s4
  %s6 = sld [smem:[#allocation0]]
  $region42: #{tpu_custom_call.1} parent=0
    _
  %s8 = ssub.s32 1, %s6
  %s9 = scalar_select 0, %s8, %s6
  $region1: #{tpu_custom_call.1} parent=0
    #allocation2 [shape = 'u8[65536]{0}', space=vmem, size = 0x10000, scoped, tag = 'input window, operand 0, single buffered']
    #allocation3 [shape = 's32[1]{0}', space=sflag, size = 0x4, scoped, tag = 'scoped memory for tpu_custom_call.1']
    #allocation4 [shape = 's32[1]{0}', space=sflag, size = 0x4, scoped, tag = 'scoped memory for tpu_custom_call.1']
    #allocation5 [shape = 'u8[16384]{0}', space=vmem, size = 0x4000, scoped, tag = 'input window, operand 1, single buffered']
    #allocation6 [shape = 's32[1]{0}', space=sflag, size = 0x4, scoped, tag = 'scoped memory for tpu_custom_call.1']
    #allocation7 [shape = 'u8[16384]{0}', space=vmem, size = 0x4000, scoped, tag = 'input window, operand 2, single buffered']
    #allocation8 [shape = 'u8[65536]{0}', space=vmem, size = 0x10000, scoped, tag = 'output window, operand 0, single buffered']
    #allocation9 [shape = 'u8[65536]{0}', space=vmem, size = 0x10000, scoped, tag = 'output window, operand 1, single buffered']
    #allocation10 [shape = 's32[1]{0}', space=sflag, size = 0x4, scoped, tag = 'scoped memory for tpu_custom_call.1']
    %10 = vsyncpa [#allocation3], 0
    %11 = vsyncpa [#allocation6], 0
    %12 = vsyncpa [#allocation4], 0
    %13 = vsyncpa [#allocation10], 0
    // Predicated region
    $region2: #{tpu_custom_call.1} parent=1 // pred_check
      _
    $region3: #{tpu_custom_call.1} parent=1 // pred_check_branch
      %15 = sbr.rel (0) target = $region5
    $region4: #{tpu_custom_call.1} parent=1 // pred_region
      %s17 = ssub.s32 2048, 2048
      %18 = vsyncadd [#allocation3], %s17
      %s19 = sshll.u32 [#allocation2], 4
      %s20 = int_to_ptr.vmem [resolvable:$true] %s19
      %25 = dma.hbm_to_vmem [thread:$0]  %s0, 2048, %s20, [#allocation3], 256, 256, 16
    $region5: #{tpu_custom_call.1} parent=1 // pred_fallthru
      _
    // Predicated region
    $region6: #{tpu_custom_call.1} parent=1 // pred_check
      _
    $region7: #{tpu_custom_call.1} parent=1 // pred_check_branch
      %27 = sbr.rel (0) target = $region9
    $region8: #{tpu_custom_call.1} parent=1 // pred_region
      %s29 = ssub.s32 512, 512
      %30 = vsyncadd [#allocation6], %s29
      %s31 = sshll.u32 [#allocation5], 4
      %s32 = int_to_ptr.vmem [resolvable:$true] %s31
      %37 = dma.hbm_to_vmem [thread:$0]  %s1, 512, %s32, [#allocation6], 128, 128, 8
    $region9: #{tpu_custom_call.1} parent=1 // pred_fallthru
      _
    // Predicated region
    $region10: #{tpu_custom_call.1} parent=1 // pred_check
      _
    $region11: #{tpu_custom_call.1} parent=1 // pred_check_branch
      %39 = sbr.rel (0) target = $region13
    $region12: #{tpu_custom_call.1} parent=1 // pred_region
      %s41 = ssub.s32 512, 512
      %42 = vsyncadd [#allocation6], %s41
      %s43 = sshll.u32 [#allocation7], 4
      %s44 = int_to_ptr.vmem [resolvable:$true] %s43
      %49 = dma.hbm_to_vmem [thread:$0]  %s2, 512, %s44, [#allocation6], 128, 128, 8
    $region13: #{tpu_custom_call.1} parent=1 // pred_fallthru
      _
    // Predicated region
    $region14: #{tpu_custom_call.1} parent=1 // pred_check
      _
    $region15: #{tpu_custom_call.1} parent=1 // pred_check_branch
      %51 = sbr.rel (0) target = $region17
    $region16: #{tpu_custom_call.1} parent=1 // pred_region
      %52 = dma.done [#allocation3], 2048
    $region17: #{tpu_custom_call.1} parent=1 // pred_fallthru
      _
    // Predicated region
    $region18: #{tpu_custom_call.1} parent=1 // pred_check
      _
    $region19: #{tpu_custom_call.1} parent=1 // pred_check_branch
      %54 = sbr.rel (0) target = $region21
    $region20: #{tpu_custom_call.1} parent=1 // pred_region
      %55 = dma.done [#allocation6], 512
    $region21: #{tpu_custom_call.1} parent=1 // pred_fallthru
      _
    // Predicated region
    $region22: #{tpu_custom_call.1} parent=1 // pred_check
      _
    $region23: #{tpu_custom_call.1} parent=1 // pred_check_branch
      %57 = sbr.rel (0) target = $region25
    $region24: #{tpu_custom_call.1} parent=1 // pred_region
      %58 = dma.done [#allocation6], 512
    $region25: #{tpu_custom_call.1} parent=1 // pred_fallthru
      _
    %v59 = vld [vmem:[#allocation2] sm:$0xff]
    %v60 = vld [vmem:[#allocation2 + $0x8] sm:$0xff]
    %v61 = vld [vmem:[#allocation2 + $0x10] sm:$0xff]
    %v62 = vld [vmem:[#allocation2 + $0x18] sm:$0xff]
    %v63 = vld [vmem:[#allocation2 + $0x20] sm:$0xff]
    %v64 = vld [vmem:[#allocation2 + $0x28] sm:$0xff]
    %v65 = vld [vmem:[#allocation2 + $0x30] sm:$0xff]
    %v66 = vld [vmem:[#allocation2 + $0x38] sm:$0xff]
    %v67 = vld [vmem:[#allocation2 + $0x40] sm:$0xff]
    %v68 = vld [vmem:[#allocation2 + $0x48] sm:$0xff]
    %v69 = vld [vmem:[#allocation2 + $0x50] sm:$0xff]
    %v70 = vld [vmem:[#allocation2 + $0x58] sm:$0xff]
    %v71 = vld [vmem:[#allocation2 + $0x60] sm:$0xff]
    %v72 = vld [vmem:[#allocation2 + $0x68] sm:$0xff]
    %v73 = vld [vmem:[#allocation2 + $0x70] sm:$0xff]
    %v74 = vld [vmem:[#allocation2 + $0x78] sm:$0xff]
    %v75 = vadd.f32 %v59, %v60
    %76 = vadd.xlane.f32.xlu0 %v75
    %v77 = vpop.xlane.xlu0 %76
    %v78 = vadd.f32 %v61, %v62
    %79 = vadd.xlane.f32.xlu0 %v78
    %v80 = vpop.xlane.xlu0 %79
    %v81 = vadd.f32 %v63, %v64
    %82 = vadd.xlane.f32.xlu0 %v81
    %v83 = vpop.xlane.xlu0 %82
    %v84 = vadd.f32 %v65, %v66
    %85 = vadd.xlane.f32.xlu0 %v84
    %v86 = vpop.xlane.xlu0 %85
    %v87 = vadd.f32 %v67, %v68
    %88 = vadd.xlane.f32.xlu0 %v87
    %v89 = vpop.xlane.xlu0 %88
    %v90 = vadd.f32 %v69, %v70
    %91 = vadd.xlane.f32.xlu0 %v90
    %v92 = vpop.xlane.xlu0 %91
    %v93 = vadd.f32 %v71, %v72
    %94 = vadd.xlane.f32.xlu0 %v93
    %v95 = vpop.xlane.xlu0 %94
    %v96 = vadd.f32 %v73, %v74
    %97 = vadd.xlane.f32.xlu0 %v96
    %v98 = vpop.xlane.xlu0 %97
    %v99 = vmul.f32 %v77, 0.00390625
    %v100 = vmul.f32 %v80, 0.00390625
    %v101 = vmul.f32 %v83, 0.00390625
    %v102 = vmul.f32 %v86, 0.00390625
    %v103 = vmul.f32 %v89, 0.00390625
    %v104 = vmul.f32 %v92, 0.00390625
    %v105 = vmul.f32 %v95, 0.00390625
    %v106 = vmul.f32 %v98, 0.00390625
    %v107 = vld [vmem:[#allocation5] sm:$0xff]
    %v108 = vld [vmem:[#allocation5 + $0x8] sm:$0xff]
    %v109 = vld [vmem:[#allocation5 + $0x10] sm:$0xff]
    %v110 = vld [vmem:[#allocation5 + $0x18] sm:$0xff]
    %v119 = vlaneseq
    %v120 = vand.u32 %v119, 127
    %v121 = vlaneseq
    %v122 = vshrl.u32 %v121, 7
    %v123 = vsub.s32 %v120, %v122
    %v124 = vrot.slane %v99, %v123
    %v125 = vadd.s32 %v120, 4294967288
    %v126 = vlaneseq
    %v127 = vshrl.u32 %v126, 7
    %v128 = vsub.s32 %v125, %v127
    %v129 = vrot.slane %v100, %v128
    %vm130 = vcmask 130112
    %v131 = vsel %vm130, %v129, %v124
    %v132 = vadd.s32 %v120, 4294967280
    %v133 = vlaneseq
    %v134 = vshrl.u32 %v133, 7
    %v135 = vsub.s32 %v132, %v134
    %v136 = vrot.slane %v101, %v135
    %vm137 = vcmask 195712
    %v138 = vsel %vm137, %v136, %v131
    %v139 = vadd.s32 %v120, 4294967272
    %v140 = vlaneseq
    %v141 = vshrl.u32 %v140, 7
    %v142 = vsub.s32 %v139, %v141
    %v143 = vrot.slane %v102, %v142
    %vm144 = vcmask 261312
    %v145 = vsel %vm144, %v143, %v138
    %v146 = vlaneseq
    %v147 = vshrl.u32 %v146, 7
    %v148 = vsub.s32 %v120, %v147
    %v149 = vrot.slane %v103, %v148
    %v150 = vlaneseq
    %v151 = vshrl.u32 %v150, 7
    %v152 = vsub.s32 %v125, %v151
    %v153 = vrot.slane %v104, %v152
    %v154 = vsel %vm130, %v153, %v149
    %v155 = vlaneseq
    %v156 = vshrl.u32 %v155, 7
    %v157 = vsub.s32 %v132, %v156
    %v158 = vrot.slane %v105, %v157
    %v159 = vsel %vm137, %v158, %v154
    %v160 = vlaneseq
    %v161 = vshrl.u32 %v160, 7
    %v162 = vsub.s32 %v139, %v161
    %v163 = vrot.slane %v106, %v162
    %v164 = vsel %vm144, %v163, %v159
    %vm165 = vcmask 1041409
    %v166 = vsel %vm165, %v164, %v145
    %vm167 = vcmask 261120
    %v168 = vsel %vm167, %v166, 0
    %v171 = vsel %vm167, %v107, 0
    %v174 = vsel %vm167, %v108, 0
    %v177 = vsel %vm167, %v109, 0
    %v180 = vsel %vm167, %v110, 0
    %182 = vmatprep.subr.mxu0 0.0
    %183 = vmatpush1.xpose.msra.mxu0 %v171
    %184 = vmatprep.subr.mxu0 0.0
    %185 = vmatpush1.xpose.msra.mxu0 %v174
    %186 = vmatprep.subr.mxu0 0.0
    %187 = vmatpush1.xpose.msra.mxu0 %v177
    %188 = vmatprep.subr.mxu0 0.0
    %189 = vmatpush1.xpose.msra.mxu0 %v180
    %190 = vmatprep.subr.mxu0 0.0
    %191 = vmatpush1.xpose.msra.mxu0 0.0
    %192 = vmatprep.subr.mxu0 0.0
    %193 = vmatpush1.xpose.msra.mxu0 0.0
    %194 = vmatprep.subr.mxu0 0.0
    %195 = vmatpush1.xpose.msra.mxu0 0.0
    %196 = vmatprep.subr.mxu0 0.0
    %197 = vmatpush1.xpose.msra.mxu0 0.0
    %198 = vmatprep.subr.mxu0 0.0
    %199 = vmatpush1.xpose.msra.mxu0 0.0
    %200 = vmatprep.subr.mxu0 0.0
    %201 = vmatpush1.xpose.msra.mxu0 0.0
    %202 = vmatprep.subr.mxu0 0.0
    %203 = vmatpush1.xpose.msra.mxu0 0.0
    %204 = vmatprep.subr.mxu0 0.0
    %205 = vmatpush1.xpose.msra.mxu0 0.0
    %206 = vmatprep.subr.mxu0 0.0
    %207 = vmatpush1.xpose.msra.mxu0 0.0
    %208 = vmatprep.subr.mxu0 0.0
    %209 = vmatpush1.xpose.msra.mxu0 0.0
    %210 = vmatprep.subr.mxu0 0.0
    %211 = vmatpush1.xpose.msra.mxu0 0.0
    %212 = vmatprep.subr.mxu0 0.0
    %213 = vmatpush1.xpose.msra.mxu0 0.0
    %214 = vmatprep.subr.mxu0 0.0
    %215 = vmatpush1.xpose.msra.mxu0 0.0
    %216 = vmatprep.subr.mxu0 0.0
    %217 = vmatpush1.xpose.msra.mxu0 0.0
    %218 = vmatprep.subr.mxu0 0.0
    %219 = vmatpush1.xpose.msra.mxu0 0.0
    %220 = vmatprep.subr.mxu0 0.0
    %221 = vmatpush1.xpose.msra.mxu0 0.0
    %222 = vmatprep.subr.mxu0 0.0
    %223 = vmatpush1.xpose.msra.mxu0 0.0
    %224 = vmatprep.subr.mxu0 0.0
    %225 = vmatpush1.xpose.msra.mxu0 0.0
    %226 = vmatprep.subr.mxu0 0.0
    %227 = vmatpush1.xpose.msra.mxu0 0.0
    %228 = vmatprep.subr.mxu0 0.0
    %229 = vmatpush1.xpose.msra.mxu0 0.0
    %230 = vmatprep.subr.mxu0 0.0
    %231 = vmatpush1.xpose.msra.mxu0 0.0
    %232 = vmatprep.subr.mxu0 0.0
    %233 = vmatpush1.xpose.msra.mxu0 0.0
    %234 = vmatprep.subr.mxu0 0.0
    %235 = vmatpush1.xpose.msra.mxu0 0.0
    %236 = vmatprep.subr.mxu0 0.0
    %237 = vmatpush1.xpose.msra.mxu0 0.0
    %238 = vmatprep.subr.mxu0 0.0
    %239 = vmatpush1.xpose.msra.mxu0 0.0
    %240 = vmatprep.subr.mxu0 0.0
    %241 = vmatpush1.xpose.msra.mxu0 0.0
    %242 = vmatprep.subr.mxu0 0.0
    %243 = vmatpush1.xpose.msra.mxu0 0.0
    %244 = vmatprep.subr.mxu0 0.0
    %245 = vmatpush1.xpose.msra.mxu0 0.0
    %246 = vmatprep.mubr.f32.mxu0 0.0
    %247 = vmatmul.mubr.f32.gmra.mrb[0].mxu0 %v168
    %v248 = vpop.f32.mrb[0].mxu0
    %v249 = vadd.f32 0.0, %v248
    %v250 = vpop.f32.mrb[0].mxu0
    %251 = vdwg.mxu0
    %v252 = vmax.f32 %v249, 0.0
    %v253 = vld [vmem:[#allocation7] sm:$0xff]
    %v254 = vld [vmem:[#allocation7 + $0x8] sm:$0xff]
    %v255 = vld [vmem:[#allocation7 + $0x10] sm:$0xff]
    %v256 = vld [vmem:[#allocation7 + $0x18] sm:$0xff]
    %v258 = vsel %vm167, %v252, 0
    %v261 = vsel %vm167, %v253, 0
    %v264 = vsel %vm167, %v254, 0
    %v267 = vsel %vm167, %v255, 0
    %v270 = vsel %vm167, %v256, 0
    %272 = vmatprep.subr.mxu0 0.0
    %273 = vmatpush1.xpose.msra.mxu0 %v261
    %274 = vmatprep.subr.mxu0 0.0
    %275 = vmatpush1.xpose.msra.mxu0 %v264
    %276 = vmatprep.subr.mxu0 0.0
    %277 = vmatpush1.xpose.msra.mxu0 %v267
    %278 = vmatprep.subr.mxu0 0.0
    %279 = vmatpush1.xpose.msra.mxu0 %v270
    %280 = vmatprep.subr.mxu0 0.0
    %281 = vmatpush1.xpose.msra.mxu0 0.0
    %282 = vmatprep.subr.mxu0 0.0
    %283 = vmatpush1.xpose.msra.mxu0 0.0
    %284 = vmatprep.subr.mxu0 0.0
    %285 = vmatpush1.xpose.msra.mxu0 0.0
    %286 = vmatprep.subr.mxu0 0.0
    %287 = vmatpush1.xpose.msra.mxu0 0.0
    %288 = vmatprep.subr.mxu0 0.0
    %289 = vmatpush1.xpose.msra.mxu0 0.0
    %290 = vmatprep.subr.mxu0 0.0
    %291 = vmatpush1.xpose.msra.mxu0 0.0
    %292 = vmatprep.subr.mxu0 0.0
    %293 = vmatpush1.xpose.msra.mxu0 0.0
    %294 = vmatprep.subr.mxu0 0.0
    %295 = vmatpush1.xpose.msra.mxu0 0.0
    %296 = vmatprep.subr.mxu0 0.0
    %297 = vmatpush1.xpose.msra.mxu0 0.0
    %298 = vmatprep.subr.mxu0 0.0
    %299 = vmatpush1.xpose.msra.mxu0 0.0
    %300 = vmatprep.subr.mxu0 0.0
    %301 = vmatpush1.xpose.msra.mxu0 0.0
    %302 = vmatprep.subr.mxu0 0.0
    %303 = vmatpush1.xpose.msra.mxu0 0.0
    %304 = vmatprep.subr.mxu0 0.0
    %305 = vmatpush1.xpose.msra.mxu0 0.0
    %306 = vmatprep.subr.mxu0 0.0
    %307 = vmatpush1.xpose.msra.mxu0 0.0
    %308 = vmatprep.subr.mxu0 0.0
    %309 = vmatpush1.xpose.msra.mxu0 0.0
    %310 = vmatprep.subr.mxu0 0.0
    %311 = vmatpush1.xpose.msra.mxu0 0.0
    %312 = vmatprep.subr.mxu0 0.0
    %313 = vmatpush1.xpose.msra.mxu0 0.0
    %314 = vmatprep.subr.mxu0 0.0
    %315 = vmatpush1.xpose.msra.mxu0 0.0
    %316 = vmatprep.subr.mxu0 0.0
    %317 = vmatpush1.xpose.msra.mxu0 0.0
    %318 = vmatprep.subr.mxu0 0.0
    %319 = vmatpush1.xpose.msra.mxu0 0.0
    %320 = vmatprep.subr.mxu0 0.0
    %321 = vmatpush1.xpose.msra.mxu0 0.0
    %322 = vmatprep.subr.mxu0 0.0
    %323 = vmatpush1.xpose.msra.mxu0 0.0
    %324 = vmatprep.subr.mxu0 0.0
    %325 = vmatpush1.xpose.msra.mxu0 0.0
    %326 = vmatprep.subr.mxu0 0.0
    %327 = vmatpush1.xpose.msra.mxu0 0.0
    %328 = vmatprep.subr.mxu0 0.0
    %329 = vmatpush1.xpose.msra.mxu0 0.0
    %330 = vmatprep.subr.mxu0 0.0
    %331 = vmatpush1.xpose.msra.mxu0 0.0
    %332 = vmatprep.subr.mxu0 0.0
    %333 = vmatpush1.xpose.msra.mxu0 0.0
    %334 = vmatprep.subr.mxu0 0.0
    %335 = vmatpush1.xpose.msra.mxu0 0.0
    %336 = vmatprep.mubr.f32.mxu0 0.0
    %337 = vmatmul.mubr.f32.gmra.mrb[0].mxu0 %v258
    %v338 = vpop.f32.mrb[0].mxu0
    %v339 = vadd.f32 0.0, %v338
    %v340 = vpop.f32.mrb[0].mxu0
    %341 = vdwg.mxu0
    %v342 = vxor.u32 %v339, 2147483648
    %v343 = vmul.f32 %v342, 1.442695
    %v344 = vpow.pop %v343
    %v345 = vadd.f32 %v344, 1.0
    %v346 = vrcp.pop %v345
    %v347 = vmul.f32 1.0, %v346
    %v348 = vlaneseq
    %v349 = vshrl.u32 %v348, 7
    %v350 = vsub.s32 0, %v349
    %v351 = vrot.slane %v347, %v350
    %353 = vbcast.lane.b32.xlu0 %v351, 256
    %v354 = vpop.permute.xlu0 %353
    %s356 = sor.u32 256, 8
    %357 = vbcast.lane.b32.xlu0 %v351, %s356
    %v358 = vpop.permute.xlu0 %357
    %s360 = sor.u32 256, 16
    %361 = vbcast.lane.b32.xlu0 %v351, %s360
    %v362 = vpop.permute.xlu0 %361
    %s364 = sor.u32 256, 24
    %365 = vbcast.lane.b32.xlu0 %v351, %s364
    %v366 = vpop.permute.xlu0 %365
    %v367 = vlaneseq
    %v368 = vshrl.u32 %v367, 7
    %v369 = vsub.s32 1, %v368
    %v370 = vrot.slane %v347, %v369
    %372 = vbcast.lane.b32.xlu0 %v370, 256
    %v373 = vpop.permute.xlu0 %372
    %s375 = sor.u32 256, 8
    %376 = vbcast.lane.b32.xlu0 %v370, %s375
    %v377 = vpop.permute.xlu0 %376
    %s379 = sor.u32 256, 16
    %380 = vbcast.lane.b32.xlu0 %v370, %s379
    %v381 = vpop.permute.xlu0 %380
    %s383 = sor.u32 256, 24
    %384 = vbcast.lane.b32.xlu0 %v370, %s383
    %v385 = vpop.permute.xlu0 %384
    %v386 = vmul.f32 %v59, %v354
    %v387 = vmul.f32 %v60, %v354
    %v388 = vmul.f32 %v61, %v358
    %v389 = vmul.f32 %v62, %v358
    %v390 = vmul.f32 %v63, %v362
    %v391 = vmul.f32 %v64, %v362
    %v392 = vmul.f32 %v65, %v366
    %v393 = vmul.f32 %v66, %v366
    %v394 = vmul.f32 %v67, %v373
    %v395 = vmul.f32 %v68, %v373
    %v396 = vmul.f32 %v69, %v377
    %v397 = vmul.f32 %v70, %v377
    %v398 = vmul.f32 %v71, %v381
    %v399 = vmul.f32 %v72, %v381
    %v400 = vmul.f32 %v73, %v385
    %v401 = vmul.f32 %v74, %v385
    %402 = vst [vmem:[#allocation9] sm:$0xff] %v386
    %403 = vst [vmem:[#allocation9 + $0x8] sm:$0xff] %v387
    %404 = vst [vmem:[#allocation9 + $0x10] sm:$0xff] %v388
    %405 = vst [vmem:[#allocation9 + $0x18] sm:$0xff] %v389
    %406 = vst [vmem:[#allocation9 + $0x20] sm:$0xff] %v390
    %407 = vst [vmem:[#allocation9 + $0x28] sm:$0xff] %v391
    %408 = vst [vmem:[#allocation9 + $0x30] sm:$0xff] %v392
    %409 = vst [vmem:[#allocation9 + $0x38] sm:$0xff] %v393
    %410 = vst [vmem:[#allocation9 + $0x40] sm:$0xff] %v394
    %411 = vst [vmem:[#allocation9 + $0x48] sm:$0xff] %v395
    %412 = vst [vmem:[#allocation9 + $0x50] sm:$0xff] %v396
    %413 = vst [vmem:[#allocation9 + $0x58] sm:$0xff] %v397
    %414 = vst [vmem:[#allocation9 + $0x60] sm:$0xff] %v398
    %415 = vst [vmem:[#allocation9 + $0x68] sm:$0xff] %v399
    %416 = vst [vmem:[#allocation9 + $0x70] sm:$0xff] %v400
    %417 = vst [vmem:[#allocation9 + $0x78] sm:$0xff] %v401
    %v418 = vsub.f32 %v59, %v386
    %v419 = vsub.f32 %v60, %v387
    %v420 = vsub.f32 %v61, %v388
    %v421 = vsub.f32 %v62, %v389
    %v422 = vsub.f32 %v63, %v390
    %v423 = vsub.f32 %v64, %v391
    %v424 = vsub.f32 %v65, %v392
    %v425 = vsub.f32 %v66, %v393
    %v426 = vsub.f32 %v67, %v394
    %v427 = vsub.f32 %v68, %v395
    %v428 = vsub.f32 %v69, %v396
    %v429 = vsub.f32 %v70, %v397
    %v430 = vsub.f32 %v71, %v398
    %v431 = vsub.f32 %v72, %v399
    %v432 = vsub.f32 %v73, %v400
    %v433 = vsub.f32 %v74, %v401
    %434 = vst [vmem:[#allocation8] sm:$0xff] %v418
    %435 = vst [vmem:[#allocation8 + $0x8] sm:$0xff] %v419
    %436 = vst [vmem:[#allocation8 + $0x10] sm:$0xff] %v420
    %437 = vst [vmem:[#allocation8 + $0x18] sm:$0xff] %v421
    %438 = vst [vmem:[#allocation8 + $0x20] sm:$0xff] %v422
    %439 = vst [vmem:[#allocation8 + $0x28] sm:$0xff] %v423
    %440 = vst [vmem:[#allocation8 + $0x30] sm:$0xff] %v424
    %441 = vst [vmem:[#allocation8 + $0x38] sm:$0xff] %v425
    %442 = vst [vmem:[#allocation8 + $0x40] sm:$0xff] %v426
    %443 = vst [vmem:[#allocation8 + $0x48] sm:$0xff] %v427
    %444 = vst [vmem:[#allocation8 + $0x50] sm:$0xff] %v428
    %445 = vst [vmem:[#allocation8 + $0x58] sm:$0xff] %v429
    %446 = vst [vmem:[#allocation8 + $0x60] sm:$0xff] %v430
    %447 = vst [vmem:[#allocation8 + $0x68] sm:$0xff] %v431
    %448 = vst [vmem:[#allocation8 + $0x70] sm:$0xff] %v432
    %449 = vst [vmem:[#allocation8 + $0x78] sm:$0xff] %v433
    // Predicated region
    $region26: #{tpu_custom_call.1} parent=1 // pred_check
      _
    $region27: #{tpu_custom_call.1} parent=1 // pred_check_branch
      %451 = sbr.rel (0) target = $region29
    $region28: #{tpu_custom_call.1} parent=1 // pred_region
      %s453 = ssub.s32 2048, 2048
      %454 = vsyncadd [#allocation4], %s453
      %s455 = sshll.u32 [#allocation8], 4
      %s456 = int_to_ptr.vmem [resolvable:$true] %s455
      %461 = dma.vmem_to_hbm [thread:$0]  %s456, 2048, %s3, [#allocation4], 256, 256, 16
    $region29: #{tpu_custom_call.1} parent=1 // pred_fallthru
      _
    // Predicated region
    $region30: #{tpu_custom_call.1} parent=1 // pred_check
      _
    $region31: #{tpu_custom_call.1} parent=1 // pred_check_branch
      %463 = sbr.rel (0) target = $region33
    $region32: #{tpu_custom_call.1} parent=1 // pred_region
      %s465 = ssub.s32 2048, 2048
      %466 = vsyncadd [#allocation10], %s465
      %s467 = sshll.u32 [#allocation9], 4
      %s468 = int_to_ptr.vmem [resolvable:$true] %s467
      %473 = dma.vmem_to_hbm [thread:$0]  %s468, 2048, %s4, [#allocation10], 256, 256, 16
    $region33: #{tpu_custom_call.1} parent=1 // pred_fallthru
      _
    // Predicated region
    $region34: #{tpu_custom_call.1} parent=1 // pred_check
      _
    $region35: #{tpu_custom_call.1} parent=1 // pred_check_branch
      %475 = sbr.rel (0) target = $region37
    $region36: #{tpu_custom_call.1} parent=1 // pred_region
      %476 = dma.done [#allocation4], 2048
    $region37: #{tpu_custom_call.1} parent=1 // pred_fallthru
      _
    // Predicated region
    $region38: #{tpu_custom_call.1} parent=1 // pred_check
      _
    $region39: #{tpu_custom_call.1} parent=1 // pred_check_branch
      %478 = sbr.rel (0) target = $region41
    $region40: #{tpu_custom_call.1} parent=1 // pred_region
      %479 = dma.done [#allocation10], 2048
    $region41: #{tpu_custom_call.1} parent=1 // pred_fallthru
      _
    %480 = vsyncpa [#allocation3], 1
    %481 = vsyncpa [#allocation6], 1
    %482 = vsyncpa [#allocation4], 1
    %483 = vsyncpa [#allocation10], 1

</llo_original>
